<compile_context>
chip_gen: v7x
topology: tpu7x:2x2x1
jax: 0.10.0
libtpu: 0.0.40
codegen_flags: <defaults>
</compile_context>

<pallas_src>
import numpy as np
import jax
import jax.numpy as jnp
from jax.experimental import pallas as pl
from jax.experimental.pallas import tpu as pltpu


_TWO_PI = np.float32(2.0 * np.pi)
_INV_TWO_PI = np.float32(1.0 / (2.0 * np.pi))


def _round_up(x, m):
    return (x + m - 1) // m * m


def prepare_timestep_embedding_params(w1, b1, w2, b2, *, integer_timesteps=True):
    """One-time (init-time) preprocessing of the module parameters.

    w1: (F, D) = torch Linear(freq_emb_dim, dim).weight.T,  b1: (D,)
    w2: (D, D) = torch Linear(dim, dim).weight.T,            b2: (D,)
    """
    F, D = w1.shape
    j = np.arange(F, dtype=np.float64)
    denom = np.float64(10000.0) ** (2.0 * j / np.float64(F))          # exact in f64
    if integer_timesteps:
        # sin(t*denom) == sin(t*(denom mod 2pi)) exactly for integer t; keeps the
        # in-kernel argument small and the phase accurate.
        denom = np.mod(denom, 2.0 * np.pi)
    phase = np.where(np.arange(F) % 2 == 0, 0.0, np.pi / 2.0)         # even->sin, odd->cos
    return dict(
        denom=jnp.asarray(denom.reshape(1, F), jnp.float32),
        phase=jnp.asarray(phase.reshape(1, F), jnp.float32),
        w1=jnp.asarray(w1, jnp.bfloat16),
        b1=jnp.asarray(b1, jnp.float32).reshape(1, D),
        w2=jnp.asarray(w2, jnp.bfloat16),
        b2=jnp.asarray(b2, jnp.float32).reshape(1, D),
    )


def _timestep_embedding_kernel(t_ref, denom_ref, phase_ref,
                               w1_ref, b1_ref, w2_ref, b2_ref, o_ref):
    # ---- sinusoidal positional encoding: 1 mul, 1-pass mod-2pi, 1 EUP sin / element ----
    arg = t_ref[...] * denom_ref[...]                       # (TB,1)*(1,F) -> (TB,F) f32
    arg = arg - jnp.floor(arg * _INV_TWO_PI) * _TWO_PI      # single range-reduction pass
    emb = jnp.sin(arg + phase_ref[...])                     # even cols: sin, odd cols: cos

    # ---- MLP: Linear(F,D) -> SiLU -> Linear(D,D).  MXU bf16 operands, f32 accumulate ----
    h = jnp.dot(emb.astype(jnp.bfloat16), w1_ref[...],
                preferred_element_type=jnp.float32) + b1_ref[...]
    # SiLU with a single transcendental: sigmoid(x) = 0.5*tanh(0.5*x) + 0.5
    h = h * (0.5 * jnp.tanh(0.5 * h) + 0.5)
    o_ref[...] = jnp.dot(h.astype(jnp.bfloat16), w2_ref[...],
                         preferred_element_type=jnp.float32) + b2_ref[...]


def timestep_embedding(t, params, *, block_b=1024):
    """t: (B,) float timesteps -> (B, D) f32; forward of the PyTorch TimeStepEmbedding."""
    denom, phase = params["denom"], params["phase"]
    w1, b1, w2, b2 = params["w1"], params["b1"], params["w2"], params["b2"]
    F, D = w1.shape
    B = t.shape[0]

    # Row tile: multiple of 8 (sublane) and as large as possible (per-step overhead
    # dominates; working set at tb=1024 is < 2 MiB).  When B allows, size the tile so
    # the grid has >= 2 steps so the "parallel" axis shards across v7x's 2 TensorCores.
    Bp8 = _round_up(B, 8)
    if Bp8 >= 16:
        tb = min(block_b, _round_up((Bp8 + 1) // 2, 8))
    else:
        tb = Bp8
    Bp = _round_up(Bp8, tb)

    t_f32 = t.astype(jnp.float32)
    if Bp != B:
        t_f32 = jnp.zeros((Bp,), jnp.float32).at[:B].set(t_f32)
    t2 = t_f32.reshape(Bp, 1)

    out = pl.pallas_call(
        _timestep_embedding_kernel,
        out_shape=jax.ShapeDtypeStruct((Bp, D), jnp.float32),
        grid=(Bp // tb,),
        in_specs=[
            pl.BlockSpec((tb, 1), lambda i: (i, 0)),   # t      : tiled over batch
            pl.BlockSpec((1, F), lambda i: (0, 0)),    # denom  : VMEM-resident
            pl.BlockSpec((1, F), lambda i: (0, 0)),    # phase  : VMEM-resident
            pl.BlockSpec((F, D), lambda i: (0, 0)),    # W1 bf16: VMEM-resident
            pl.BlockSpec((1, D), lambda i: (0, 0)),    # b1     : VMEM-resident
            pl.BlockSpec((D, D), lambda i: (0, 0)),    # W2 bf16: VMEM-resident
            pl.BlockSpec((1, D), lambda i: (0, 0)),    # b2     : VMEM-resident
        ],
        out_specs=pl.BlockSpec((tb, D), lambda i: (i, 0)),   # lane-dense (TB, D)
        compiler_params=pltpu.CompilerParams(
            dimension_semantics=("parallel",)),        # megacore / v7x 2-TC sharding
        cost_estimate=pl.CostEstimate(
            flops=2 * Bp * (F * D + D * D) + 6 * Bp * F,
            transcendentals=Bp * (F + D),
            bytes_accessed=4 * Bp * (1 + D) + 2 * (F * D + D * D) + 8 * (F + D),
        ),
    )(t2, denom, phase, w1, b1, w2, b2)
    return out[:B]


def reference(t, w1, b1, w2, b2):
    """Independent reference: exact float64 (numpy) positional encoding, then f32 MLP."""
    F = w1.shape[0]
    j = np.arange(F, dtype=np.float64)
    denom = np.float64(10000.0) ** (2.0 * j / np.float64(F))
    arg = np.asarray(t, np.float64)[:, None] * denom[None, :]
    emb = np.where(np.arange(F)[None, :] % 2 == 0, np.sin(arg), np.cos(arg))
    emb = jnp.asarray(emb, jnp.float32)
    h = jnp.dot(emb, w1, precision=jax.lax.Precision.HIGHEST) + b1
    h = h * jax.nn.sigmoid(h)
    return jnp.dot(h, w2, precision=jax.lax.Precision.HIGHEST) + b2


if __name__ == "__main__":
    B = 8
    FREQ_EMB_DIM = 256   # module default
    DIM = 128

    key = jax.random.PRNGKey(0)
    k_t, k_w1, k_b1, k_w2, k_b2 = jax.random.split(key, 5)

    # Integer-valued diffusion timesteps in [0, 1000).
    t = jax.random.randint(k_t, (B,), 0, 1000).astype(jnp.float32)
    w1 = jax.random.normal(k_w1, (FREQ_EMB_DIM, DIM), jnp.float32) * 0.02
    b1 = jax.random.normal(k_b1, (DIM,), jnp.float32) * 0.02
    w2 = jax.random.normal(k_w2, (DIM, DIM), jnp.float32) * 0.02
    b2 = jax.random.normal(k_b2, (DIM,), jnp.float32) * 0.02

    params = prepare_timestep_embedding_params(w1, b1, w2, b2)   # one-time hoisted work
    out = jax.block_until_ready(timestep_embedding(t, params))

    ref = reference(t, w1, b1, w2, b2)
    assert out.shape == (B, DIM)
    assert out.dtype == jnp.float32
    assert bool(jnp.isfinite(out).all()), "non-finite values in kernel output"
    max_err = float(jnp.max(jnp.abs(out - ref)))
    # bf16 MXU operands (f32 accumulation) + f32 pos-enc vs float64/f32 reference:
    # observed error is ~1e-3 at these weight scales.
    assert max_err < 1e-2, f"mismatch vs reference: max |err| = {max_err}"

    print("KERNEL_OK")
</pallas_src>

<mosaic_0001>
module attributes {stable_mosaic.version = 11 : i64} {
  func.func @_timestep_embedding_kernel(%arg0: i32, %arg1: memref<8x1xf32, #tpu.memory_space<vmem>>, %arg2: memref<1x256xf32, #tpu.memory_space<vmem>>, %arg3: memref<1x256xf32, #tpu.memory_space<vmem>>, %arg4: memref<256x128xbf16, #tpu.memory_space<vmem>>, %arg5: memref<1x128xf32, #tpu.memory_space<vmem>>, %arg6: memref<128x128xbf16, #tpu.memory_space<vmem>>, %arg7: memref<1x128xf32, #tpu.memory_space<vmem>>, %arg8: memref<8x128xf32, #tpu.memory_space<vmem>>) attributes {dimension_semantics = [#tpu.dimension_semantics<parallel>], iteration_bounds = array<i64: 1>, scalar_prefetch = 0 : i64, scratch_operands = 0 : i64, tpu.core_type = #tpu.core_type<tc>, window_params = [{transform_indices = @transform_0, window_bounds = array<i64: 8, 1>}, {pipeline_mode = #tpu.pipeline_mode<synchronous>, transform_indices = @transform_1, window_bounds = array<i64: 1, 256>}, {pipeline_mode = #tpu.pipeline_mode<synchronous>, transform_indices = @transform_2, window_bounds = array<i64: 1, 256>}, {pipeline_mode = #tpu.pipeline_mode<synchronous>, transform_indices = @transform_3, window_bounds = array<i64: 256, 128>}, {pipeline_mode = #tpu.pipeline_mode<synchronous>, transform_indices = @transform_4, window_bounds = array<i64: 1, 128>}, {pipeline_mode = #tpu.pipeline_mode<synchronous>, transform_indices = @transform_5, window_bounds = array<i64: 128, 128>}, {pipeline_mode = #tpu.pipeline_mode<synchronous>, transform_indices = @transform_6, window_bounds = array<i64: 1, 128>}, {transform_indices = @transform_7, window_bounds = array<i64: 8, 128>}]} {
    %c0 = arith.constant 0 : index
    %c0_0 = arith.constant 0 : index
    %0 = vector.load %arg1[%c0, %c0_0] : memref<8x1xf32, #tpu.memory_space<vmem>>, vector<8x1xf32>
    %c0_1 = arith.constant 0 : index
    %c0_2 = arith.constant 0 : index
    %1 = vector.load %arg2[%c0_1, %c0_2] : memref<1x256xf32, #tpu.memory_space<vmem>>, vector<1x256xf32>
    %2 = vector.broadcast %0 : vector<8x1xf32> to vector<8x256xf32>
    %3 = vector.broadcast %1 : vector<1x256xf32> to vector<8x256xf32>
    %4 = arith.mulf %2, %3 : vector<8x256xf32>
    %cst = arith.constant 0.159154937 : f32
    %5 = vector.broadcast %cst : f32 to vector<8x256xf32>
    %6 = arith.mulf %4, %5 : vector<8x256xf32>
    %7 = math.floor %6 : vector<8x256xf32>
    %cst_3 = arith.constant 6.28318548 : f32
    %8 = vector.broadcast %cst_3 : f32 to vector<8x256xf32>
    %9 = arith.mulf %7, %8 : vector<8x256xf32>
    %10 = arith.subf %4, %9 : vector<8x256xf32>
    %c0_4 = arith.constant 0 : index
    %c0_5 = arith.constant 0 : index
    %11 = vector.load %arg3[%c0_4, %c0_5] : memref<1x256xf32, #tpu.memory_space<vmem>>, vector<1x256xf32>
    %12 = vector.broadcast %11 : vector<1x256xf32> to vector<8x256xf32>
    %13 = arith.addf %10, %12 : vector<8x256xf32>
    %14 = math.sin %13 : vector<8x256xf32>
    %15 = arith.truncf %14 : vector<8x256xf32> to vector<8x256xbf16>
    %c0_6 = arith.constant 0 : index
    %c0_7 = arith.constant 0 : index
    %16 = vector.load %arg4[%c0_6, %c0_7] : memref<256x128xbf16, #tpu.memory_space<vmem>>, vector<256x128xbf16>
    %cst_8 = arith.constant dense<0.000000e+00> : vector<8x128xf32>
    %17 = tpu.matmul %15, %16, %cst_8 {dimension_numbers = #tpu.dot_dimension_numbers<[1], [0], [0], [1], [0, 0, 1, 1], [], []>} : vector<8x256xbf16>, vector<256x128xbf16>, vector<8x128xf32> -> vector<8x128xf32>
    %c0_9 = arith.constant 0 : index
    %c0_10 = arith.constant 0 : index
    %18 = vector.load %arg5[%c0_9, %c0_10] : memref<1x128xf32, #tpu.memory_space<vmem>>, vector<1x128xf32>
    %19 = vector.broadcast %18 : vector<1x128xf32> to vector<8x128xf32>
    %20 = arith.addf %17, %19 : vector<8x128xf32>
    %cst_11 = arith.constant 5.000000e-01 : f32
    %21 = vector.broadcast %cst_11 : f32 to vector<8x128xf32>
    %22 = arith.mulf %21, %20 : vector<8x128xf32>
    %23 = math.tanh %22 : vector<8x128xf32>
    %cst_12 = arith.constant 5.000000e-01 : f32
    %24 = vector.broadcast %cst_12 : f32 to vector<8x128xf32>
    %25 = arith.mulf %24, %23 : vector<8x128xf32>
    %cst_13 = arith.constant 5.000000e-01 : f32
    %26 = vector.broadcast %cst_13 : f32 to vector<8x128xf32>
    %27 = arith.addf %25, %26 : vector<8x128xf32>
    %28 = arith.mulf %20, %27 : vector<8x128xf32>
    %29 = arith.truncf %28 : vector<8x128xf32> to vector<8x128xbf16>
    %c0_14 = arith.constant 0 : index
    %c0_15 = arith.constant 0 : index
    %30 = vector.load %arg6[%c0_14, %c0_15] : memref<128x128xbf16, #tpu.memory_space<vmem>>, vector<128x128xbf16>
    %cst_16 = arith.constant dense<0.000000e+00> : vector<8x128xf32>
    %31 = tpu.matmul %29, %30, %cst_16 {dimension_numbers = #tpu.dot_dimension_numbers<[1], [0], [0], [1], [0, 0, 1, 1], [], []>} : vector<8x128xbf16>, vector<128x128xbf16>, vector<8x128xf32> -> vector<8x128xf32>
    %c0_17 = arith.constant 0 : index
    %c0_18 = arith.constant 0 : index
    %32 = vector.load %arg7[%c0_17, %c0_18] : memref<1x128xf32, #tpu.memory_space<vmem>>, vector<1x128xf32>
    %33 = vector.broadcast %32 : vector<1x128xf32> to vector<8x128xf32>
    %34 = arith.addf %31, %33 : vector<8x128xf32>
    %c0_19 = arith.constant 0 : index
    %c0_20 = arith.constant 0 : index
    %35 = vector.load %arg8[%c0_19, %c0_20] : memref<8x128xf32, #tpu.memory_space<vmem>>, vector<8x128xf32>
    tpu.vector_store %arg8[%c0_19, %c0_20], %34 {strides = array<i32>} : memref<8x128xf32, #tpu.memory_space<vmem>>, vector<8x128xf32>,
    return
  }
  func.func @transform_0(%arg0: i32) -> (i32, i32) {
    %c0_i32 = arith.constant 0 : i32
    %c0_i32_0 = arith.constant 0 : i32
    return %arg0, %c0_i32 : i32, i32
  }
  func.func @transform_1(%arg0: i32) -> (i32, i32) {
    %c0_i32 = arith.constant 0 : i32
    %c0_i32_0 = arith.constant 0 : i32
    %c0_i32_1 = arith.constant 0 : i32
    return %c0_i32, %c0_i32_0 : i32, i32
  }
  func.func @transform_2(%arg0: i32) -> (i32, i32) {
    %c0_i32 = arith.constant 0 : i32
    %c0_i32_0 = arith.constant 0 : i32
    %c0_i32_1 = arith.constant 0 : i32
    return %c0_i32, %c0_i32_0 : i32, i32
  }
  func.func @transform_3(%arg0: i32) -> (i32, i32) {
    %c0_i32 = arith.constant 0 : i32
    %c0_i32_0 = arith.constant 0 : i32
    %c0_i32_1 = arith.constant 0 : i32
    return %c0_i32, %c0_i32_0 : i32, i32
  }
  func.func @transform_4(%arg0: i32) -> (i32, i32) {
    %c0_i32 = arith.constant 0 : i32
    %c0_i32_0 = arith.constant 0 : i32
    %c0_i32_1 = arith.constant 0 : i32
    return %c0_i32, %c0_i32_0 : i32, i32
  }
  func.func @transform_5(%arg0: i32) -> (i32, i32) {
    %c0_i32 = arith.constant 0 : i32
    %c0_i32_0 = arith.constant 0 : i32
    %c0_i32_1 = arith.constant 0 : i32
    return %c0_i32, %c0_i32_0 : i32, i32
  }
  func.func @transform_6(%arg0: i32) -> (i32, i32) {
    %c0_i32 = arith.constant 0 : i32
    %c0_i32_0 = arith.constant 0 : i32
    %c0_i32_1 = arith.constant 0 : i32
    return %c0_i32, %c0_i32_0 : i32, i32
  }
  func.func @transform_7(%arg0: i32) -> (i32, i32) {
    %c0_i32 = arith.constant 0 : i32
    %c0_i32_0 = arith.constant 0 : i32
    return %arg0, %c0_i32 : i32, i32
  }
}

</mosaic_0001>

<llo_original>
// kernel: tpu_custom_call.1
$region0: #{tpu_custom_call.1}
  #allocation0 [shape = 'u32[]', space=smem, size = 0x4, offset = 0x4, fixed_abs, tag = 'smem constant byte address 0x4 - core index']
  #allocation1 [shape = 'u32[144,128]{1,0:T(1,128)}', space=vmem, size = 0x12000, scoped, tag = 'internal scratch']
  %s0 = inlined_call_operand.vmem [shape: f32[8,1], index: 0, kind: input, shape index: {}]
  %s1 = inlined_call_operand.vmem [shape: f32[1,256], index: 1, kind: input, shape index: {}]
  %s2 = inlined_call_operand.vmem [shape: f32[1,256], index: 2, kind: input, shape index: {}]
  %s3 = inlined_call_operand.hbm [shape: bf16[256,128], index: 3, kind: input, shape index: {}]
  %s4 = inlined_call_operand.vmem [shape: f32[1,128], index: 4, kind: input, shape index: {}]
  %s5 = inlined_call_operand.hbm [shape: bf16[128,128], index: 5, kind: input, shape index: {}]
  %s6 = inlined_call_operand.vmem [shape: f32[1,128], index: 6, kind: input, shape index: {}]
  %s7 = inlined_call_operand.hbm [shape: f32[8,128], index: 7, kind: output, shape index: {}]
  %s8 = sld [smem:[#allocation0]]
  $region46: #{tpu_custom_call.1} parent=0
    _
  %s10 = ssub.s32 1, %s8
  %s11 = scalar_select 0, %s10, %s8
  $region1: #{tpu_custom_call.1} parent=0
    #allocation2 [shape = 'u8[65536]{0}', space=vmem, size = 0x10000, scoped, tag = 'input window, operand 3, single buffered']
    #allocation3 [shape = 's32[1]{0}', space=sflag, size = 0x4, scoped, tag = 'scoped memory for tpu_custom_call.1']
    #allocation4 [shape = 's32[1]{0}', space=sflag, size = 0x4, scoped, tag = 'scoped memory for tpu_custom_call.1']
    #allocation5 [shape = 'u8[32768]{0}', space=vmem, size = 0x8000, scoped, tag = 'input window, operand 5, single buffered']
    #allocation6 [shape = 's32[1]{0}', space=sflag, size = 0x4, scoped, tag = 'scoped memory for tpu_custom_call.1']
    #allocation7 [shape = 'u8[4096]{0}', space=vmem, size = 0x1000, scoped, tag = 'output window, operand 0, single buffered']
    %12 = vsyncpa [#allocation3], 0
    %13 = vsyncpa [#allocation6], 0
    %14 = vsyncpa [#allocation4], 0
    // Predicated region
    $region2: #{tpu_custom_call.1} parent=1 // pred_check
      _
    $region3: #{tpu_custom_call.1} parent=1 // pred_check_branch
      %16 = sbr.rel (0) target = $region5
    $region4: #{tpu_custom_call.1} parent=1 // pred_region
      _
    $region5: #{tpu_custom_call.1} parent=1 // pred_fallthru
      _
    // Predicated region
    $region6: #{tpu_custom_call.1} parent=1 // pred_check
      _
    $region7: #{tpu_custom_call.1} parent=1 // pred_check_branch
      %18 = sbr.rel (0) target = $region9
    $region8: #{tpu_custom_call.1} parent=1 // pred_region
      _
    $region9: #{tpu_custom_call.1} parent=1 // pred_fallthru
      _
    // Predicated region
    $region10: #{tpu_custom_call.1} parent=1 // pred_check
      _
    $region11: #{tpu_custom_call.1} parent=1 // pred_check_branch
      %20 = sbr.rel (0) target = $region13
    $region12: #{tpu_custom_call.1} parent=1 // pred_region
      _
    $region13: #{tpu_custom_call.1} parent=1 // pred_fallthru
      _
    // Predicated region
    $region14: #{tpu_custom_call.1} parent=1 // pred_check
      _
    $region15: #{tpu_custom_call.1} parent=1 // pred_check_branch
      %22 = sbr.rel (0) target = $region17
    $region16: #{tpu_custom_call.1} parent=1 // pred_region
      %s24 = ssub.s32 2048, 2048
      %25 = vsyncadd [#allocation3], %s24
      %s26 = sshll.u32 [#allocation2], 4
      %s27 = int_to_ptr.vmem [resolvable:$true] %s26
      %32 = dma.hbm_to_vmem [thread:$0]  %s3, 2048, %s27, [#allocation3], 64, 64, 4
    $region17: #{tpu_custom_call.1} parent=1 // pred_fallthru
      _
    // Predicated region
    $region18: #{tpu_custom_call.1} parent=1 // pred_check
      _
    $region19: #{tpu_custom_call.1} parent=1 // pred_check_branch
      %34 = sbr.rel (0) target = $region21
    $region20: #{tpu_custom_call.1} parent=1 // pred_region
      _
    $region21: #{tpu_custom_call.1} parent=1 // pred_fallthru
      _
    // Predicated region
    $region22: #{tpu_custom_call.1} parent=1 // pred_check
      _
    $region23: #{tpu_custom_call.1} parent=1 // pred_check_branch
      %36 = sbr.rel (0) target = $region25
    $region24: #{tpu_custom_call.1} parent=1 // pred_region
      %s38 = ssub.s32 1024, 1024
      %39 = vsyncadd [#allocation6], %s38
      %s40 = sshll.u32 [#allocation5], 4
      %s41 = int_to_ptr.vmem [resolvable:$true] %s40
      %46 = dma.hbm_to_vmem [thread:$0]  %s5, 1024, %s41, [#allocation6], 64, 64, 4
    $region25: #{tpu_custom_call.1} parent=1 // pred_fallthru
      _
    // Predicated region
    $region26: #{tpu_custom_call.1} parent=1 // pred_check
      _
    $region27: #{tpu_custom_call.1} parent=1 // pred_check_branch
      %48 = sbr.rel (0) target = $region29
    $region28: #{tpu_custom_call.1} parent=1 // pred_region
      _
    $region29: #{tpu_custom_call.1} parent=1 // pred_fallthru
      _
    // Predicated region
    $region30: #{tpu_custom_call.1} parent=1 // pred_check
      _
    $region31: #{tpu_custom_call.1} parent=1 // pred_check_branch
      %50 = sbr.rel (0) target = $region33
    $region32: #{tpu_custom_call.1} parent=1 // pred_region
      %51 = dma.done [#allocation3], 2048
    $region33: #{tpu_custom_call.1} parent=1 // pred_fallthru
      _
    // Predicated region
    $region34: #{tpu_custom_call.1} parent=1 // pred_check
      _
    $region35: #{tpu_custom_call.1} parent=1 // pred_check_branch
      %53 = sbr.rel (0) target = $region37
    $region36: #{tpu_custom_call.1} parent=1 // pred_region
      %54 = dma.done [#allocation6], 1024
    $region37: #{tpu_custom_call.1} parent=1 // pred_fallthru
      _
    %v56 = vld [vmem:[%s0] sm:$0xff]
    %v57 = vld [vmem:[%s1] sm:$0x3]
    %59 = vset.pattern.permute.xlu0 0
    %60 = vperm.xlu0 %59, %v56
    %v61 = vpop.permute.xlu0 %60
    %v64 = vlaneseq
    %v65 = vshrl.u32 %v64, 7
    %v66 = vsub.s32 0, %v65
    %v67 = vrot.slane %v57, %v66
    %v68 = vlaneseq
    %v69 = vshrl.u32 %v68, 7
    %v70 = vsub.s32 1, %v69
    %v71 = vrot.slane %v57, %v70
    %v74 = vmul.f32 %v61, %v67
    %v75 = vmul.f32 %v61, %v71
    %v76 = vmul.f32 %v74, 0.15915494
    %v77 = vmul.f32 %v75, 0.15915494
    %v78 = vfloor.f32 %v76
    %v79 = vfloor.f32 %v77
    %v80 = vmul.f32 %v78, 6.2831855
    %v81 = vmul.f32 %v79, 6.2831855
    %v82 = vsub.f32 %v74, %v80
    %v83 = vsub.f32 %v75, %v81
    %v84 = vld [vmem:[%s2] sm:$0x3]
    %v86 = vlaneseq
    %v87 = vshrl.u32 %v86, 7
    %v88 = vsub.s32 0, %v87
    %v89 = vrot.slane %v84, %v88
    %v90 = vlaneseq
    %v91 = vshrl.u32 %v90, 7
    %v92 = vsub.s32 1, %v91
    %v93 = vrot.slane %v84, %v92
    %v96 = vadd.f32 %v82, %v89
    %v97 = vadd.f32 %v83, %v93
    %v98 = vand.u32 2147483647, %v96
    %vm99 = vcmp.le.f32.partialorder %v98, 0.7853982
    %vm100 = vcmp.lt.s32.totalorder %v96, 0
    %v101 = vand.u32 %v96, 2139095040
    %v102 = vshrl.u32 %v101, 23
    %v103 = vsub.s32 %v102, 127
    %v104 = vand.u32 2147483647, %v96
    %v105 = vand.u32 %v104, 8388607
    %v106 = vor.u32 %v105, 8388608
    %v107 = vsub.s32 0, %v106
    %v108 = vadd.s32 %v103, 1
    %vm109 = vcmp.gt.s32.totalorder %v108, 0
    %v110 = vsel %vm109, %v108, 0
    %v111 = vshrl.u32 %v110, 5
    %v112 = vand.u32 %v110, 31
    %v113 = vsub.s32 32, %v112
    %v114 = vshrl.u32 683565275, %v113
    %v115 = vshll.u32 683565275, %v112
    %v116 = vshrl.u32 2475754826, %v113
    %v117 = vor.u32 %v115, %v116
    %v118 = vshll.u32 2475754826, %v112
    %v119 = vshrl.u32 2131351028, %v113
    %v120 = vor.u32 %v118, %v119
    %v121 = vshll.u32 2131351028, %v112
    %v122 = vshrl.u32 2102212464, %v113
    %v123 = vor.u32 %v121, %v122
    %v124 = vshll.u32 2102212464, %v112
    %v125 = vshrl.u32 920167782, %v113
    %v126 = vor.u32 %v124, %v125
    %v127 = vshll.u32 920167782, %v112
    %v128 = vshrl.u32 1326507024, %v113
    %v129 = vor.u32 %v127, %v128
    %vm130 = vcmp.lt.s32.totalorder %v111, 1
    %vm131 = vcmp.lt.s32.totalorder %v111, 2
    %vm132 = vcmp.lt.s32.totalorder %v111, 3
    %vm133 = vcmp.lt.s32.totalorder %v111, 4
    %v134 = vsel %vm130, %v114, %v117
    %v135 = vsel %vm133, %v123, 2102212464
    %v136 = vsel %vm132, %v120, %v135
    %v137 = vsel %vm131, %v134, %v136
    %v138 = vsel %vm130, %v117, %v120
    %v139 = vsel %vm133, %v126, 920167782
    %v140 = vsel %vm132, %v123, %v139
    %v141 = vsel %vm131, %v138, %v140
    %v142 = vsel %vm130, %v120, %v123
    %v143 = vsel %vm133, %v129, 1326507024
    %v144 = vsel %vm132, %v126, %v143
    %v145 = vsel %vm131, %v142, %v144
    %v146 = vshll.u32 %v106, 8
    %v147 = vmul.u32.u64.compose %v146, %v145
    %v148 = vextract.low.u32 %v147
    %v149 = vextract.high.u32 %v147
    %v150 = vmul.u32.u64.compose %v146, %v141
    %v151 = vextract.low.u32 %v150
    %v152 = vextract.high.u32 %v150
    %v153 = vmul.u32 %v146, %v137
    %v154 = vadd.s32 %v149, %v151
    %vm155 = vc.u32 %v149, %v151
    %v156 = vadd.s32 %v152, 1
    %v157 = vsel %vm155, %v156, %v152
    %v158 = vadd.s32 %v153, %v157
    %v159 = vadd.s32 %v158, 536870912
    %v160 = vshrl.u32 %v159, 30
    %v161 = vshll.u32 %v160, 30
    %v162 = vsub.s32 %v158, %v161
    %vm163 = vcmp.lt.s32.totalorder %v162, 0
    %v164 = vsub.s32 0, %v162
    %v165 = vsel %vm163, %v164, %v162
    %v166 = vclz %v165
    %v167 = vsub.s32 %v166, 2
    %vm168 = vcmp.gt.s32.totalorder 0, %v167
    %v169 = vsel %vm168, 0, %v167
    %v170 = vsub.s32 32, %v169
    %v171 = vshll.u32 %v162, %v169
    %v172 = vshrl.u32 %v154, %v170
    %v173 = vor.u32 %v171, %v172
    %v174 = vsub.s32 4294967266, %v169
    %v175 = vadd.s32 %v174, 127
    %v176 = vshll.u32 %v175, 23
    %v177 = vor.u32 4788187, %v176
    %v178 = vand.u32 2147483647, %v177
    %v180 = vcvt.s32.f32 %v173
    %v181 = vmul.f32 %v180, %v178
    %v182 = vxor.u32 %v181, 2147483648
    %v183 = vsel %vm100, %v182, %v181
    %v184 = vsub.s32 4, %v160
    %v185 = vsel %vm100, %v184, %v160
    %v186 = vsel %vm99, %v96, %v183
    %v187 = vsel %vm99, 0, %v185
    %v188 = vcosq.f32.pop %v186
    %v189 = vsinq.f32.pop %v186
    %vm190 = vweird.f32 %v96
    %v191 = vadd.s32 %v187, 3
    %v192 = vand.u32 %v191, 3
    %vm193 = vcmp.lt.s32.totalorder %v192, 2
    %vm194 = vcmp.eq.s32.totalorder %v192, 0
    %v195 = vxor.u32 %v189, 2147483648
    %v196 = vsel %vm194, %v188, %v195
    %vm197 = vcmp.eq.s32.totalorder %v192, 2
    %v198 = vxor.u32 %v188, 2147483648
    %v199 = vsel %vm197, %v198, %v189
    %v200 = vsel %vm193, %v196, %v199
    %v201 = vsel %vm190, nan, %v200
    %v202 = vand.u32 2147483647, %v97
    %vm203 = vcmp.le.f32.partialorder %v202, 0.7853982
    %vm204 = vcmp.lt.s32.totalorder %v97, 0
    %v205 = vand.u32 %v97, 2139095040
    %v206 = vshrl.u32 %v205, 23
    %v207 = vsub.s32 %v206, 127
    %v208 = vand.u32 2147483647, %v97
    %v209 = vand.u32 %v208, 8388607
    %v210 = vor.u32 %v209, 8388608
    %v211 = vsub.s32 0, %v210
    %v212 = vadd.s32 %v207, 1
    %vm213 = vcmp.gt.s32.totalorder %v212, 0
    %v214 = vsel %vm213, %v212, 0
    %v215 = vshrl.u32 %v214, 5
    %v216 = vand.u32 %v214, 31
    %v217 = vsub.s32 32, %v216
    %v218 = vshrl.u32 683565275, %v217
    %v219 = vshll.u32 683565275, %v216
    %v220 = vshrl.u32 2475754826, %v217
    %v221 = vor.u32 %v219, %v220
    %v222 = vshll.u32 2475754826, %v216
    %v223 = vshrl.u32 2131351028, %v217
    %v224 = vor.u32 %v222, %v223
    %v225 = vshll.u32 2131351028, %v216
    %v226 = vshrl.u32 2102212464, %v217
    %v227 = vor.u32 %v225, %v226
    %v228 = vshll.u32 2102212464, %v216
    %v229 = vshrl.u32 920167782, %v217
    %v230 = vor.u32 %v228, %v229
    %v231 = vshll.u32 920167782, %v216
    %v232 = vshrl.u32 1326507024, %v217
    %v233 = vor.u32 %v231, %v232
    %vm234 = vcmp.lt.s32.totalorder %v215, 1
    %vm235 = vcmp.lt.s32.totalorder %v215, 2
    %vm236 = vcmp.lt.s32.totalorder %v215, 3
    %vm237 = vcmp.lt.s32.totalorder %v215, 4
    %v238 = vsel %vm234, %v218, %v221
    %v239 = vsel %vm237, %v227, 2102212464
    %v240 = vsel %vm236, %v224, %v239
    %v241 = vsel %vm235, %v238, %v240
    %v242 = vsel %vm234, %v221, %v224
    %v243 = vsel %vm237, %v230, 920167782
    %v244 = vsel %vm236, %v227, %v243
    %v245 = vsel %vm235, %v242, %v244
    %v246 = vsel %vm234, %v224, %v227
    %v247 = vsel %vm237, %v233, 1326507024
    %v248 = vsel %vm236, %v230, %v247
    %v249 = vsel %vm235, %v246, %v248
    %v250 = vshll.u32 %v210, 8
    %v251 = vmul.u32.u64.compose %v250, %v249
    %v252 = vextract.low.u32 %v251
    %v253 = vextract.high.u32 %v251
    %v254 = vmul.u32.u64.compose %v250, %v245
    %v255 = vextract.low.u32 %v254
    %v256 = vextract.high.u32 %v254
    %v257 = vmul.u32 %v250, %v241
    %v258 = vadd.s32 %v253, %v255
    %vm259 = vc.u32 %v253, %v255
    %v260 = vadd.s32 %v256, 1
    %v261 = vsel %vm259, %v260, %v256
    %v262 = vadd.s32 %v257, %v261
    %v263 = vadd.s32 %v262, 536870912
    %v264 = vshrl.u32 %v263, 30
    %v265 = vshll.u32 %v264, 30
    %v266 = vsub.s32 %v262, %v265
    %vm267 = vcmp.lt.s32.totalorder %v266, 0
    %v268 = vsub.s32 0, %v266
    %v269 = vsel %vm267, %v268, %v266
    %v270 = vclz %v269
    %v271 = vsub.s32 %v270, 2
    %vm272 = vcmp.gt.s32.totalorder 0, %v271
    %v273 = vsel %vm272, 0, %v271
    %v274 = vsub.s32 32, %v273
    %v275 = vshll.u32 %v266, %v273
    %v276 = vshrl.u32 %v258, %v274
    %v277 = vor.u32 %v275, %v276
    %v278 = vsub.s32 4294967266, %v273
    %v279 = vadd.s32 %v278, 127
    %v280 = vshll.u32 %v279, 23
    %v281 = vor.u32 4788187, %v280
    %v282 = vand.u32 2147483647, %v281
    %v284 = vcvt.s32.f32 %v277
    %v285 = vmul.f32 %v284, %v282
    %v286 = vxor.u32 %v285, 2147483648
    %v287 = vsel %vm204, %v286, %v285
    %v288 = vsub.s32 4, %v264
    %v289 = vsel %vm204, %v288, %v264
    %v290 = vsel %vm203, %v97, %v287
    %v291 = vsel %vm203, 0, %v289
    %v292 = vcosq.f32.pop %v290
    %v293 = vsinq.f32.pop %v290
    %vm294 = vweird.f32 %v97
    %v295 = vadd.s32 %v291, 3
    %v296 = vand.u32 %v295, 3
    %vm297 = vcmp.lt.s32.totalorder %v296, 2
    %vm298 = vcmp.eq.s32.totalorder %v296, 0
    %v299 = vxor.u32 %v293, 2147483648
    %v300 = vsel %vm298, %v292, %v299
    %vm301 = vcmp.eq.s32.totalorder %v296, 2
    %v302 = vxor.u32 %v292, 2147483648
    %v303 = vsel %vm301, %v302, %v293
    %v304 = vsel %vm297, %v300, %v303
    %v305 = vsel %vm294, nan, %v304
    %v306 = vpack.c.bf16 %v201, %v201
    %v307 = vpack.c.bf16 %v305, %v305
    %v308 = vld [vmem:[#allocation2] sm:$0xf]
    %v309 = vld [vmem:[#allocation2 + $0x4] sm:$0xf]
    %v310 = vld [vmem:[#allocation2 + $0x8] sm:$0xf]
    %v311 = vld [vmem:[#allocation2 + $0xc] sm:$0xf]
    %v312 = vld [vmem:[#allocation2 + $0x10] sm:$0xf]
    %v313 = vld [vmem:[#allocation2 + $0x14] sm:$0xf]
    %v314 = vld [vmem:[#allocation2 + $0x18] sm:$0xf]
    %v315 = vld [vmem:[#allocation2 + $0x1c] sm:$0xf]
    %v316 = vld [vmem:[#allocation2 + $0x20] sm:$0xf]
    %v317 = vld [vmem:[#allocation2 + $0x24] sm:$0xf]
    %v318 = vld [vmem:[#allocation2 + $0x28] sm:$0xf]
    %v319 = vld [vmem:[#allocation2 + $0x2c] sm:$0xf]
    %v320 = vld [vmem:[#allocation2 + $0x30] sm:$0xf]
    %v321 = vld [vmem:[#allocation2 + $0x34] sm:$0xf]
    %v322 = vld [vmem:[#allocation2 + $0x38] sm:$0xf]
    %v323 = vld [vmem:[#allocation2 + $0x3c] sm:$0xf]
    %v324 = vld [vmem:[#allocation2 + $0x40] sm:$0xf]
    %v325 = vld [vmem:[#allocation2 + $0x44] sm:$0xf]
    %v326 = vld [vmem:[#allocation2 + $0x48] sm:$0xf]
    %v327 = vld [vmem:[#allocation2 + $0x4c] sm:$0xf]
    %v328 = vld [vmem:[#allocation2 + $0x50] sm:$0xf]
    %v329 = vld [vmem:[#allocation2 + $0x54] sm:$0xf]
    %v330 = vld [vmem:[#allocation2 + $0x58] sm:$0xf]
    %v331 = vld [vmem:[#allocation2 + $0x5c] sm:$0xf]
    %v332 = vld [vmem:[#allocation2 + $0x60] sm:$0xf]
    %v333 = vld [vmem:[#allocation2 + $0x64] sm:$0xf]
    %v334 = vld [vmem:[#allocation2 + $0x68] sm:$0xf]
    %v335 = vld [vmem:[#allocation2 + $0x6c] sm:$0xf]
    %v336 = vld [vmem:[#allocation2 + $0x70] sm:$0xf]
    %v337 = vld [vmem:[#allocation2 + $0x74] sm:$0xf]
    %v338 = vld [vmem:[#allocation2 + $0x78] sm:$0xf]
    %v339 = vld [vmem:[#allocation2 + $0x7c] sm:$0xf]
    %v340 = vld [vmem:[%s4] sm:$0x1]
    %v342 = vlaneseq
    %v343 = vshrl.u32 %v342, 7
    %v344 = vsub.s32 0, %v343
    %v345 = vrot.slane %v340, %v344
    %v379 = vunpack.c.l.b16 %v308
    %v380 = vunpack.c.l.b16 %v309
    %v381 = vunpack.c.l.b16 %v310
    %v382 = vunpack.c.l.b16 %v311
    %v383 = vunpack.c.l.b16 %v312
    %v384 = vunpack.c.l.b16 %v313
    %v385 = vunpack.c.l.b16 %v314
    %v386 = vunpack.c.l.b16 %v315
    %v387 = vunpack.c.l.b16 %v316
    %v388 = vunpack.c.l.b16 %v317
    %v389 = vunpack.c.l.b16 %v318
    %v390 = vunpack.c.l.b16 %v319
    %v391 = vunpack.c.l.b16 %v320
    %v392 = vunpack.c.l.b16 %v321
    %v393 = vunpack.c.l.b16 %v322
    %v394 = vunpack.c.l.b16 %v323
    %v395 = vunpack.c.l.b16 %v324
    %v396 = vunpack.c.l.b16 %v325
    %v397 = vunpack.c.l.b16 %v326
    %v398 = vunpack.c.l.b16 %v327
    %v399 = vunpack.c.l.b16 %v328
    %v400 = vunpack.c.l.b16 %v329
    %v401 = vunpack.c.l.b16 %v330
    %v402 = vunpack.c.l.b16 %v331
    %v403 = vunpack.c.l.b16 %v332
    %v404 = vunpack.c.l.b16 %v333
    %v405 = vunpack.c.l.b16 %v334
    %v406 = vunpack.c.l.b16 %v335
    %v407 = vunpack.c.l.b16 %v336
    %v408 = vunpack.c.l.b16 %v337
    %v409 = vunpack.c.l.b16 %v338
    %v410 = vunpack.c.l.b16 %v339
    %v411 = vpack.c.b16 %v380, %v379
    %v412 = vpack.c.b16 %v382, %v381
    %v413 = vpack.c.b16 %v384, %v383
    %v414 = vpack.c.b16 %v386, %v385
    %v415 = vpack.c.b16 %v388, %v387
    %v416 = vpack.c.b16 %v390, %v389
    %v417 = vpack.c.b16 %v392, %v391
    %v418 = vpack.c.b16 %v394, %v393
    %v419 = vpack.c.b16 %v396, %v395
    %v420 = vpack.c.b16 %v398, %v397
    %v421 = vpack.c.b16 %v400, %v399
    %v422 = vpack.c.b16 %v402, %v401
    %v423 = vpack.c.b16 %v404, %v403
    %v424 = vpack.c.b16 %v406, %v405
    %v425 = vpack.c.b16 %v408, %v407
    %v426 = vpack.c.b16 %v410, %v409
    %443 = vmatprep.subr.bf16.mxu0 0
    %444 = vmatpush1.bf16.msra.mxu0 %v411
    %445 = vmatprep.subr.bf16.mxu0 0
    %446 = vmatpush1.bf16.msra.mxu0 %v412
    %447 = vmatprep.subr.bf16.mxu0 0
    %448 = vmatpush1.bf16.msra.mxu0 %v413
    %449 = vmatprep.subr.bf16.mxu0 0
    %450 = vmatpush1.bf16.msra.mxu0 %v414
    %451 = vmatprep.subr.bf16.mxu0 0
    %452 = vmatpush1.bf16.msra.mxu0 %v415
    %453 = vmatprep.subr.bf16.mxu0 0
    %454 = vmatpush1.bf16.msra.mxu0 %v416
    %455 = vmatprep.subr.bf16.mxu0 0
    %456 = vmatpush1.bf16.msra.mxu0 %v417
    %457 = vmatprep.subr.bf16.mxu0 0
    %458 = vmatpush1.bf16.msra.mxu0 %v418
    %459 = vmatprep.subr.bf16.mxu0 0
    %460 = vmatpush1.bf16.msra.mxu0 %v419
    %461 = vmatprep.subr.bf16.mxu0 0
    %462 = vmatpush1.bf16.msra.mxu0 %v420
    %463 = vmatprep.subr.bf16.mxu0 0
    %464 = vmatpush1.bf16.msra.mxu0 %v421
    %465 = vmatprep.subr.bf16.mxu0 0
    %466 = vmatpush1.bf16.msra.mxu0 %v422
    %467 = vmatprep.subr.bf16.mxu0 0
    %468 = vmatpush1.bf16.msra.mxu0 %v423
    %469 = vmatprep.subr.bf16.mxu0 0
    %470 = vmatpush1.bf16.msra.mxu0 %v424
    %471 = vmatprep.subr.bf16.mxu0 0
    %472 = vmatpush1.bf16.msra.mxu0 %v425
    %473 = vmatprep.subr.bf16.mxu0 0
    %474 = vmatpush1.bf16.msra.mxu0 %v426
    %475 = vmatprep.mubr.bf16.mxu0 %v307
    %476 = vmatmul.mubr.bf16.gmra.mrb[0].mxu0 %v306
    %v477 = vpop.f32.mrb[0].mxu0
    %v478 = vadd.f32 %v345, %v477
    %v479 = vpop.f32.mrb[0].mxu0
    %v480 = vpop.f32.mrb[0].mxu0
    %v481 = vpop.f32.mrb[0].mxu0
    %482 = vdwg.mxu0
    %v483 = vmul.f32 %v478, 0.5
    %v484 = vtanh.pop %v483
    %v485 = vmul.f32 %v484, 0.5
    %v486 = vadd.f32 %v485, 0.5
    %v487 = vmul.f32 %v478, %v486
    %v488 = vpack.c.bf16 %v487, %v487
    %v489 = vld [vmem:[#allocation5] sm:$0xf]
    %v490 = vld [vmem:[#allocation5 + $0x4] sm:$0xf]
    %v491 = vld [vmem:[#allocation5 + $0x8] sm:$0xf]
    %v492 = vld [vmem:[#allocation5 + $0xc] sm:$0xf]
    %v493 = vld [vmem:[#allocation5 + $0x10] sm:$0xf]
    %v494 = vld [vmem:[#allocation5 + $0x14] sm:$0xf]
    %v495 = vld [vmem:[#allocation5 + $0x18] sm:$0xf]
    %v496 = vld [vmem:[#allocation5 + $0x1c] sm:$0xf]
    %v497 = vld [vmem:[#allocation5 + $0x20] sm:$0xf]
    %v498 = vld [vmem:[#allocation5 + $0x24] sm:$0xf]
    %v499 = vld [vmem:[#allocation5 + $0x28] sm:$0xf]
    %v500 = vld [vmem:[#allocation5 + $0x2c] sm:$0xf]
    %v501 = vld [vmem:[#allocation5 + $0x30] sm:$0xf]
    %v502 = vld [vmem:[#allocation5 + $0x34] sm:$0xf]
    %v503 = vld [vmem:[#allocation5 + $0x38] sm:$0xf]
    %v504 = vld [vmem:[#allocation5 + $0x3c] sm:$0xf]
    %v505 = vld [vmem:[%s6] sm:$0x1]
    %v507 = vlaneseq
    %v508 = vshrl.u32 %v507, 7
    %v509 = vsub.s32 0, %v508
    %v510 = vrot.slane %v505, %v509
    %v528 = vunpack.c.l.b16 %v489
    %v529 = vunpack.c.l.b16 %v490
    %v530 = vunpack.c.l.b16 %v491
    %v531 = vunpack.c.l.b16 %v492
    %v532 = vunpack.c.l.b16 %v493
    %v533 = vunpack.c.l.b16 %v494
    %v534 = vunpack.c.l.b16 %v495
    %v535 = vunpack.c.l.b16 %v496
    %v536 = vunpack.c.l.b16 %v497
    %v537 = vunpack.c.l.b16 %v498
    %v538 = vunpack.c.l.b16 %v499
    %v539 = vunpack.c.l.b16 %v500
    %v540 = vunpack.c.l.b16 %v501
    %v541 = vunpack.c.l.b16 %v502
    %v542 = vunpack.c.l.b16 %v503
    %v543 = vunpack.c.l.b16 %v504
    %v544 = vpack.c.b16 %v529, %v528
    %v545 = vpack.c.b16 %v531, %v530
    %v546 = vpack.c.b16 %v533, %v532
    %v547 = vpack.c.b16 %v535, %v534
    %v548 = vpack.c.b16 %v537, %v536
    %v549 = vpack.c.b16 %v539, %v538
    %v550 = vpack.c.b16 %v541, %v540
    %v551 = vpack.c.b16 %v543, %v542
    %560 = vmatprep.subr.bf16.mxu0 0
    %561 = vmatpush1.bf16.msra.mxu0 %v544
    %562 = vmatprep.subr.bf16.mxu0 0
    %563 = vmatpush1.bf16.msra.mxu0 %v545
    %564 = vmatprep.subr.bf16.mxu0 0
    %565 = vmatpush1.bf16.msra.mxu0 %v546
    %566 = vmatprep.subr.bf16.mxu0 0
    %567 = vmatpush1.bf16.msra.mxu0 %v547
    %568 = vmatprep.subr.bf16.mxu0 0
    %569 = vmatpush1.bf16.msra.mxu0 %v548
    %570 = vmatprep.subr.bf16.mxu0 0
    %571 = vmatpush1.bf16.msra.mxu0 %v549
    %572 = vmatprep.subr.bf16.mxu0 0
    %573 = vmatpush1.bf16.msra.mxu0 %v550
    %574 = vmatprep.subr.bf16.mxu0 0
    %575 = vmatpush1.bf16.msra.mxu0 %v551
    %576 = vmatprep.subr.bf16.mxu0 0
    %577 = vmatpush1.bf16.msra.mxu0 0
    %578 = vmatprep.subr.bf16.mxu0 0
    %579 = vmatpush1.bf16.msra.mxu0 0
    %580 = vmatprep.subr.bf16.mxu0 0
    %581 = vmatpush1.bf16.msra.mxu0 0
    %582 = vmatprep.subr.bf16.mxu0 0
    %583 = vmatpush1.bf16.msra.mxu0 0
    %584 = vmatprep.subr.bf16.mxu0 0
    %585 = vmatpush1.bf16.msra.mxu0 0
    %586 = vmatprep.subr.bf16.mxu0 0
    %587 = vmatpush1.bf16.msra.mxu0 0
    %588 = vmatprep.subr.bf16.mxu0 0
    %589 = vmatpush1.bf16.msra.mxu0 0
    %590 = vmatprep.subr.bf16.mxu0 0
    %591 = vmatpush1.bf16.msra.mxu0 0
    %592 = vmatprep.mubr.bf16.mxu0 0
    %593 = vmatmul.mubr.bf16.gmra.mrb[0].mxu0 %v488
    %v594 = vpop.f32.mrb[0].mxu0
    %v595 = vadd.f32 %v510, %v594
    %v596 = vpop.f32.mrb[0].mxu0
    %v597 = vpop.f32.mrb[0].mxu0
    %v598 = vpop.f32.mrb[0].mxu0
    %599 = vdwg.mxu0
    %600 = vst [vmem:[#allocation7] sm:$0xff] %v595
    // Predicated region
    $region38: #{tpu_custom_call.1} parent=1 // pred_check
      _
    $region39: #{tpu_custom_call.1} parent=1 // pred_check_branch
      %602 = sbr.rel (0) target = $region41
    $region40: #{tpu_custom_call.1} parent=1 // pred_region
      %s604 = ssub.s32 128, 128
      %605 = vsyncadd [#allocation4], %s604
      %s607 = sshll.u32 [#allocation7], 4
      %s608 = int_to_ptr.vmem [resolvable:$true] %s607
      %610 = dma.vmem_to_hbm [thread:$0]  %s608, 128, %s7, [#allocation4]
    $region41: #{tpu_custom_call.1} parent=1 // pred_fallthru
      _
    // Predicated region
    $region42: #{tpu_custom_call.1} parent=1 // pred_check
      _
    $region43: #{tpu_custom_call.1} parent=1 // pred_check_branch
      %612 = sbr.rel (0) target = $region45
    $region44: #{tpu_custom_call.1} parent=1 // pred_region
      %613 = dma.done [#allocation4], 128
    $region45: #{tpu_custom_call.1} parent=1 // pred_fallthru
      _
    %614 = vsyncpa [#allocation3], 1
    %615 = vsyncpa [#allocation6], 1
    %616 = vsyncpa [#allocation4], 1

</llo_original>
